<compile_context>
chip_gen: v7x
topology: tpu7x:2x2x1
jax: 0.10.0
libtpu: 0.0.40
codegen_flags: <defaults>
</compile_context>

<pallas_src>
import random

import numpy as np
import jax
import jax.numpy as jnp
from jax.experimental import pallas as pl
from jax.experimental.pallas import tpu as pltpu


# ----------------------------- Pallas kernel ------------------------------ #

def _scale_crop_kernel(img_ref, msk_ref, ryi_ref, rym_ref, rxi_ref, rxm_ref,
                       oimg_ref, omsk_ref, acc_img, acc_msk):
    # img_ref : (C, th, W)   image row-band of one batch element (native dtype)
    # msk_ref : (1, th, W)   int mask row-band of one batch element
    # ryi_ref : (ch, th)     bf16 bilinear row matrix (crop offset folded in), k-th tile
    # rym_ref : (ch, th)     f32 nearest one-hot row matrix, k-th tile
    # rxi_ref : (W, cw)      bf16 bilinear column matrix, pre-transposed
    # rxm_ref : (W, cw)      f32 nearest one-hot column matrix, pre-transposed
    # oimg_ref: (1, ch, C*cw)  lane-dense image output
    # omsk_ref: (1, ch, cw)    int mask output
    # acc_img : (ch, C*cw) f32 scratch accumulator (over the H-tile axis)
    # acc_msk : (ch, cw)   f32 scratch accumulator
    C, th, W = img_ref.shape
    k = pl.program_id(1)

    @pl.when(k == 0)
    def _init():
        acc_img[...] = jnp.zeros_like(acc_img)
        acc_msk[...] = jnp.zeros_like(acc_msk)

    # ---- image: bilinear resize + crop (bf16 MXU operands, f32 accumulation) ----
    # W-contraction for all C planes fused into one GEMM: (C*th, W) @ (W, cw).
    x2d = img_ref[...].reshape(C * th, W).astype(jnp.bfloat16)
    tmp = jnp.dot(x2d, rxi_ref[...], preferred_element_type=jnp.float32)      # (C*th, cw)
    # Assemble the lane-major (th, C*cw) slab (channel-major along lanes) so the
    # H-contraction is ONE lane-dense GEMM instead of C tiny per-channel matmuls.
    slab = jnp.concatenate(
        [tmp[c * th:(c + 1) * th, :] for c in range(C)], axis=1)              # (th, C*cw)
    acc_img[...] += jnp.dot(ryi_ref[...], slab.astype(jnp.bfloat16),
                            preferred_element_type=jnp.float32)               # (ch, C*cw)

    # ---- mask: nearest resize + crop via exact one-hot f32 matmuls ----
    m = msk_ref[0].astype(jnp.float32)                                        # (th, W)
    mt = jnp.dot(rym_ref[...], m, preferred_element_type=jnp.float32)         # (ch, W)
    acc_msk[...] += jnp.dot(mt, rxm_ref[...],
                            preferred_element_type=jnp.float32)               # (ch, cw)

    @pl.when(k == pl.num_programs(1) - 1)
    def _finalize():
        img = acc_img[...]
        if jnp.issubdtype(oimg_ref.dtype, jnp.integer):
            img = jnp.round(img)          # round, don't truncate, for integer images
        oimg_ref[0] = img.astype(oimg_ref.dtype)
        # One-hot selection is exact (integer-valued float) -> direct int cast.
        omsk_ref[0] = acc_msk[...].astype(omsk_ref.dtype)


# ------------------------- VMEM budget / tiling ---------------------------- #

def _vmem_budget_bytes():
    try:
        cap = pltpu.get_tpu_info().vmem_capacity_bytes
    except Exception:
        cap = 64 * 1024 * 1024            # conservative fallback (v7x physical VMEM)
    return int(cap * 0.85)                # leave headroom for Mosaic internal scratch


def _per_step_bytes(C, th, W, ch, cw, img_isz, msk_isz):
    inp = (C * th * W * img_isz + th * W * msk_isz
           + ch * th * (2 + 4) + W * cw * (2 + 4))
    out = ch * C * cw * img_isz + ch * cw * msk_isz
    scr = ch * C * cw * 4 + ch * cw * 4
    interm = C * th * W * 2 + C * th * cw * 4 + th * C * cw * (4 + 2) + ch * W * 4
    return 2 * (inp + out) + scr + interm     # x2 for double buffering


def _choose_h_tile(C, H, W, ch, cw, img_isz, msk_isz, budget):
    # th must be H or a multiple of 128 dividing H (the (ch, H) matrices put H on
    # the lane axis of their blocks).
    if _per_step_bytes(C, H, W, ch, cw, img_isz, msk_isz) <= budget or H % 128:
        return H
    cands = [t for t in range(128, H + 1, 128) if H % t == 0]
    for t in sorted(cands, reverse=True):
        if _per_step_bytes(C, t, W, ch, cw, img_isz, msk_isz) <= budget:
            return t
    return cands[0] if cands else H


# ------------------------------ fused call ---------------------------------- #

@jax.jit
def _fused_scale_crop(image, mask, ry_img, ry_msk, rxt_img, rxt_msk):
    """image: (N, C, H, W); mask: (N, H, W) int;
    ry_img/ry_msk: (crop_h, H) bf16/f32; rxt_img/rxt_msk: (W, crop_w) bf16/f32."""
    N, C, H, W = image.shape
    ch = ry_img.shape[0]
    cw = rxt_img.shape[1]
    img_isz = image.dtype.itemsize
    msk_isz = mask.dtype.itemsize

    budget = _vmem_budget_bytes()
    th = _choose_h_tile(C, H, W, ch, cw, img_isz, msk_isz, budget)
    nk = H // th
    need = _per_step_bytes(C, th, W, ch, cw, img_isz, msk_isz)
    vmem_limit = int(min(budget, max(32 * 1024 * 1024, 2 * need)))

    img_flat = image.reshape(N * C, H, W)     # merge leading dims only (free)

    out_img, out_msk = pl.pallas_call(
        _scale_crop_kernel,
        out_shape=(
            jax.ShapeDtypeStruct((N, ch, C * cw), image.dtype),
            jax.ShapeDtypeStruct((N, ch, cw), mask.dtype),
        ),
        grid=(N, nk),
        in_specs=[
            pl.BlockSpec((C, th, W), lambda n, k: (n, k, 0)),
            pl.BlockSpec((1, th, W), lambda n, k: (n, k, 0)),
            pl.BlockSpec((ch, th), lambda n, k: (0, k)),
            pl.BlockSpec((ch, th), lambda n, k: (0, k)),
            pl.BlockSpec((W, cw), lambda n, k: (0, 0)),
            pl.BlockSpec((W, cw), lambda n, k: (0, 0)),
        ],
        out_specs=(
            pl.BlockSpec((1, ch, C * cw), lambda n, k: (n, 0, 0)),
            pl.BlockSpec((1, ch, cw), lambda n, k: (n, 0, 0)),
        ),
        scratch_shapes=[
            pltpu.VMEM((ch, C * cw), jnp.float32),
            pltpu.VMEM((ch, cw), jnp.float32),
        ],
        compiler_params=pltpu.CompilerParams(
            dimension_semantics=("parallel", "arbitrary"),
            vmem_limit_bytes=vmem_limit,
        ),
    )(img_flat, mask, ry_img, ry_msk, rxt_img, rxt_msk)

    # Wrapper-side layout plumbing: (N, ch, C*cw) -> (N, C, ch, cw).
    out_img = out_img.reshape(N, ch, C, cw).transpose(0, 2, 1, 3)
    return out_img, out_msk


# ------------------------ interpolation matrices --------------------------- #

def _bilinear_rows(in_size, out_size, start, length):
    """Rows [start, start+length) of the (out_size, in_size) bilinear resize
    matrix (torch interpolate, align_corners=False, antialias=False)."""
    rows = np.arange(start, start + length, dtype=np.float64)
    scale = in_size / out_size
    src = np.maximum((rows + 0.5) * scale - 0.5, 0.0)
    i0 = np.minimum(np.floor(src).astype(np.int64), in_size - 1)
    i1 = np.minimum(i0 + 1, in_size - 1)
    w1 = src - i0
    w0 = 1.0 - w1
    m = np.zeros((length, in_size), dtype=np.float32)
    r = np.arange(length)
    np.add.at(m, (r, i0), w0.astype(np.float32))
    np.add.at(m, (r, i1), w1.astype(np.float32))
    return m


def _nearest_rows(in_size, out_size, start, length):
    """Rows of the (out_size, in_size) nearest-neighbor (one-hot) matrix,
    matching torch interpolate mode='nearest'."""
    rows = np.arange(start, start + length, dtype=np.float64)
    scale = in_size / out_size
    idx = np.minimum(np.floor(rows * scale).astype(np.int64), in_size - 1)
    m = np.zeros((length, in_size), dtype=np.float32)
    m[np.arange(length), idx] = 1.0
    return m


# ------------------------------ module port -------------------------------- #

class RandomScaleCrop:
    """Pallas port of the PyTorch RandomScaleCrop module (no learnable params)."""

    def __init__(self, base_size=(16, 32), crop_size=(8, 16),
                 scale_range=(0.5, 2.0)):
        self.base_size = base_size
        self.crop_size = crop_size
        self.scale_range = scale_range
        self.last_params = None

    def __call__(self, image, mask):
        # image: (N, C, H, W) float;  mask: (N, H, W) int
        N, C, H_in, W_in = image.shape
        crop_h, crop_w = self.crop_size

        # --- host-side randomness, same structure as the torch module ---
        scale_factor = random.uniform(*self.scale_range)
        scaled_h = int(self.base_size[0] * scale_factor)
        scaled_w = int(self.base_size[1] * scale_factor)
        if scaled_h < crop_h or scaled_w < crop_w:
            # TODO(synk): RandomCrop padding when scaled size < crop size is not implemented.
            raise ValueError("scaled size smaller than crop size; padding not implemented")
        i = random.randint(0, scaled_h - crop_h)   # RandomCrop.get_params equivalent
        j = random.randint(0, scaled_w - crop_w)
        self.last_params = (scaled_h, scaled_w, i, j)

        # --- interpolation matrices (resize + crop fused), column side pre-transposed.
        # Image matrices go to bf16 (MXU-native rate); mask one-hot stays f32 (exact).
        ry_img = _bilinear_rows(H_in, scaled_h, i, crop_h)           # (crop_h, H)
        ry_msk = _nearest_rows(H_in, scaled_h, i, crop_h)            # (crop_h, H)
        rxt_img = np.ascontiguousarray(_bilinear_rows(W_in, scaled_w, j, crop_w).T)  # (W, crop_w)
        rxt_msk = np.ascontiguousarray(_nearest_rows(W_in, scaled_w, j, crop_w).T)   # (W, crop_w)
        # TODO(synk): torchvision antialiased bilinear resize (antialias=True) is not
        # implemented; this matches F.resize / interpolate with antialias=False.

        return _fused_scale_crop(
            image, mask,
            jnp.asarray(ry_img, dtype=jnp.bfloat16),
            jnp.asarray(ry_msk, dtype=jnp.float32),
            jnp.asarray(rxt_img, dtype=jnp.bfloat16),
            jnp.asarray(rxt_msk, dtype=jnp.float32),
        )


# --------------------------------- main ------------------------------------ #

if __name__ == "__main__":
    random.seed(0)  # deterministic host-side scale / crop sampling
    key = jax.random.PRNGKey(0)
    k_img, k_msk = jax.random.split(key)

    N, C, H, W = 2, 4, 16, 32
    crop_h, crop_w = 8, 16
    image = jax.random.normal(k_img, (N, C, H, W), dtype=jnp.float32)
    mask = jax.random.randint(k_msk, (N, H, W), 0, 19, dtype=jnp.int32)

    module = RandomScaleCrop(base_size=(H, W), crop_size=(crop_h, crop_w),
                             scale_range=(0.5, 2.0))
    out_image, out_mask = module(image, mask)
    out_image = jax.block_until_ready(out_image)
    out_mask = jax.block_until_ready(out_mask)

    assert out_image.shape == (N, C, crop_h, crop_w) and out_image.dtype == image.dtype
    assert out_mask.shape == (N, crop_h, crop_w) and out_mask.dtype == mask.dtype

    # Host reference with the same scale / crop draw (full-precision matrices).
    sh, sw, i, j = module.last_params
    ryb = _bilinear_rows(H, sh, i, crop_h)
    rxb = _bilinear_rows(W, sw, j, crop_w)
    ryn = _nearest_rows(H, sh, i, crop_h)
    rxn = _nearest_rows(W, sw, j, crop_w)
    img_np = np.asarray(image, dtype=np.float64)
    msk_np = np.asarray(mask, dtype=np.float64)
    ref_img = np.einsum("ph,nchw,qw->ncpq", ryb, img_np, rxb)
    ref_msk = np.einsum("ph,nhw,qw->npq", ryn, msk_np, rxn).round().astype(np.int32)

    assert np.allclose(np.asarray(out_image), ref_img, atol=0.1, rtol=0.1), \
        "image mismatch vs host bilinear reference"
    assert np.array_equal(np.asarray(out_mask), ref_msk), \
        "mask mismatch vs host nearest reference"

    print("KERNEL_OK")
</pallas_src>

<mosaic_0001>
module attributes {stable_mosaic.version = 11 : i64} {
  func.func @_scale_crop_kernel(%arg0: i32, %arg1: i32, %arg2: memref<4x16x32xf32, #tpu.memory_space<vmem>>, %arg3: memref<1x16x32xi32, #tpu.memory_space<vmem>>, %arg4: memref<8x16xbf16, #tpu.memory_space<vmem>>, %arg5: memref<8x16xf32, #tpu.memory_space<vmem>>, %arg6: memref<32x16xbf16, #tpu.memory_space<vmem>>, %arg7: memref<32x16xf32, #tpu.memory_space<vmem>>, %arg8: memref<1x8x64xf32, #tpu.memory_space<vmem>>, %arg9: memref<1x8x16xi32, #tpu.memory_space<vmem>>, %arg10: memref<8x64xf32, #tpu.memory_space<vmem>>, %arg11: memref<8x16xf32, #tpu.memory_space<vmem>>) attributes {dimension_semantics = [#tpu.dimension_semantics<parallel>, #tpu.dimension_semantics<arbitrary>], iteration_bounds = array<i64: 2, 1>, scalar_prefetch = 0 : i64, scratch_operands = 2 : i64, tpu.core_type = #tpu.core_type<tc>, window_params = [{transform_indices = @transform_0, window_bounds = array<i64: 4, 16, 32>}, {transform_indices = @transform_1, window_bounds = array<i64: 1, 16, 32>}, {transform_indices = @transform_2, window_bounds = array<i64: 8, 16>}, {transform_indices = @transform_3, window_bounds = array<i64: 8, 16>}, {pipeline_mode = #tpu.pipeline_mode<synchronous>, transform_indices = @transform_4, window_bounds = array<i64: 32, 16>}, {pipeline_mode = #tpu.pipeline_mode<synchronous>, transform_indices = @transform_5, window_bounds = array<i64: 32, 16>}, {transform_indices = @transform_6, window_bounds = array<i64: 1, 8, 64>}, {transform_indices = @transform_7, window_bounds = array<i64: 1, 8, 16>}]} {
    %c0_i32 = arith.constant 0 : i32
    %0 = arith.cmpi eq, %arg1, %c0_i32 : i32
    %1 = arith.extui %0 : i1 to i32
    %c0_i32_0 = arith.constant 0 : i32
    %2 = arith.cmpi ne, %1, %c0_i32_0 : i32
    scf.if %2 {
      %cst_27 = arith.constant 0.000000e+00 : f32
      %32 = vector.broadcast %cst_27 : f32 to vector<8x64xf32>
      %c0_28 = arith.constant 0 : index
      %c0_29 = arith.constant 0 : index
      %33 = vector.load %arg10[%c0_28, %c0_29] : memref<8x64xf32, #tpu.memory_space<vmem>>, vector<8x64xf32>
      tpu.vector_store %arg10[%c0_28, %c0_29], %32 {strides = array<i32>} : memref<8x64xf32, #tpu.memory_space<vmem>>, vector<8x64xf32>,
      %cst_30 = arith.constant 0.000000e+00 : f32
      %34 = vector.broadcast %cst_30 : f32 to vector<8x16xf32>
      %c0_31 = arith.constant 0 : index
      %c0_32 = arith.constant 0 : index
      %35 = vector.load %arg11[%c0_31, %c0_32] : memref<8x16xf32, #tpu.memory_space<vmem>>, vector<8x16xf32>
      tpu.vector_store %arg11[%c0_31, %c0_32], %34 {strides = array<i32>} : memref<8x16xf32, #tpu.memory_space<vmem>>, vector<8x16xf32>,
    } else {
    }
    %c0 = arith.constant 0 : index
    %c0_1 = arith.constant 0 : index
    %c0_2 = arith.constant 0 : index
    %3 = vector.load %arg2[%c0, %c0_1, %c0_2] : memref<4x16x32xf32, #tpu.memory_space<vmem>>, vector<4x16x32xf32>
    %4 = vector.shape_cast %3 : vector<4x16x32xf32> to vector<64x32xf32>
    %5 = arith.truncf %4 : vector<64x32xf32> to vector<64x32xbf16>
    %c0_3 = arith.constant 0 : index
    %c0_4 = arith.constant 0 : index
    %6 = vector.load %arg6[%c0_3, %c0_4] : memref<32x16xbf16, #tpu.memory_space<vmem>>, vector<32x16xbf16>
    %cst = arith.constant dense<0.000000e+00> : vector<64x16xf32>
    %7 = tpu.matmul %5, %6, %cst {dimension_numbers = #tpu.dot_dimension_numbers<[1], [0], [0], [1], [0, 0, 1, 1], [], []>} : vector<64x32xbf16>, vector<32x16xbf16>, vector<64x16xf32> -> vector<64x16xf32>
    %8 = vector.extract_strided_slice %7 {offsets = [0, 0], sizes = [16, 16], strides = [1, 1]} : vector<64x16xf32> to vector<16x16xf32>
    %9 = vector.extract_strided_slice %7 {offsets = [16, 0], sizes = [16, 16], strides = [1, 1]} : vector<64x16xf32> to vector<16x16xf32>
    %10 = vector.extract_strided_slice %7 {offsets = [32, 0], sizes = [16, 16], strides = [1, 1]} : vector<64x16xf32> to vector<16x16xf32>
    %11 = vector.extract_strided_slice %7 {offsets = [48, 0], sizes = [16, 16], strides = [1, 1]} : vector<64x16xf32> to vector<16x16xf32>
    %12 = tpu.concatenate %8, %9, %10, %11 in 1 : vector<16x16xf32>, vector<16x16xf32>, vector<16x16xf32>, vector<16x16xf32> -> vector<16x64xf32>
    %c0_5 = arith.constant 0 : index
    %c0_6 = arith.constant 0 : index
    %13 = vector.load %arg10[%c0_5, %c0_6] : memref<8x64xf32, #tpu.memory_space<vmem>>, vector<8x64xf32>
    %c0_7 = arith.constant 0 : index
    %c0_8 = arith.constant 0 : index
    %14 = vector.load %arg4[%c0_7, %c0_8] : memref<8x16xbf16, #tpu.memory_space<vmem>>, vector<8x16xbf16>
    %15 = arith.truncf %12 : vector<16x64xf32> to vector<16x64xbf16>
    %cst_9 = arith.constant dense<0.000000e+00> : vector<8x64xf32>
    %16 = tpu.matmul %14, %15, %cst_9 {dimension_numbers = #tpu.dot_dimension_numbers<[1], [0], [0], [1], [0, 0, 1, 1], [], []>} : vector<8x16xbf16>, vector<16x64xbf16>, vector<8x64xf32> -> vector<8x64xf32>
    %17 = arith.addf %13, %16 : vector<8x64xf32>
    %c0_10 = arith.constant 0 : index
    %c0_11 = arith.constant 0 : index
    %18 = vector.load %arg10[%c0_10, %c0_11] : memref<8x64xf32, #tpu.memory_space<vmem>>, vector<8x64xf32>
    tpu.vector_store %arg10[%c0_10, %c0_11], %17 {strides = array<i32>} : memref<8x64xf32, #tpu.memory_space<vmem>>, vector<8x64xf32>,
    %c0_12 = arith.constant 0 : index
    %c0_13 = arith.constant 0 : index
    %c0_14 = arith.constant 0 : index
    %19 = vector.load %arg3[%c0_12, %c0_13, %c0_14] : memref<1x16x32xi32, #tpu.memory_space<vmem>>, vector<1x16x32xi32>
    %20 = vector.shape_cast %19 : vector<1x16x32xi32> to vector<16x32xi32>
    %21 = arith.sitofp %20 : vector<16x32xi32> to vector<16x32xf32>
    %c0_15 = arith.constant 0 : index
    %c0_16 = arith.constant 0 : index
    %22 = vector.load %arg5[%c0_15, %c0_16] : memref<8x16xf32, #tpu.memory_space<vmem>>, vector<8x16xf32>
    %cst_17 = arith.constant dense<0.000000e+00> : vector<8x32xf32>
    %23 = tpu.matmul %22, %21, %cst_17 {dimension_numbers = #tpu.dot_dimension_numbers<[1], [0], [0], [1], [0, 0, 1, 1], [], []>} : vector<8x16xf32>, vector<16x32xf32>, vector<8x32xf32> -> vector<8x32xf32>
    %c0_18 = arith.constant 0 : index
    %c0_19 = arith.constant 0 : index
    %24 = vector.load %arg11[%c0_18, %c0_19] : memref<8x16xf32, #tpu.memory_space<vmem>>, vector<8x16xf32>
    %c0_20 = arith.constant 0 : index
    %c0_21 = arith.constant 0 : index
    %25 = vector.load %arg7[%c0_20, %c0_21] : memref<32x16xf32, #tpu.memory_space<vmem>>, vector<32x16xf32>
    %cst_22 = arith.constant dense<0.000000e+00> : vector<8x16xf32>
    %26 = tpu.matmul %23, %25, %cst_22 {dimension_numbers = #tpu.dot_dimension_numbers<[1], [0], [0], [1], [0, 0, 1, 1], [], []>} : vector<8x32xf32>, vector<32x16xf32>, vector<8x16xf32> -> vector<8x16xf32>
    %27 = arith.addf %24, %26 : vector<8x16xf32>
    %c0_23 = arith.constant 0 : index
    %c0_24 = arith.constant 0 : index
    %28 = vector.load %arg11[%c0_23, %c0_24] : memref<8x16xf32, #tpu.memory_space<vmem>>, vector<8x16xf32>
    tpu.vector_store %arg11[%c0_23, %c0_24], %27 {strides = array<i32>} : memref<8x16xf32, #tpu.memory_space<vmem>>, vector<8x16xf32>,
    %c0_i32_25 = arith.constant 0 : i32
    %29 = arith.cmpi eq, %arg1, %c0_i32_25 : i32
    %30 = arith.extui %29 : i1 to i32
    %c0_i32_26 = arith.constant 0 : i32
    %31 = arith.cmpi ne, %30, %c0_i32_26 : i32
    scf.if %31 {
      %c0_27 = arith.constant 0 : index
      %c0_28 = arith.constant 0 : index
      %32 = vector.load %arg10[%c0_27, %c0_28] : memref<8x64xf32, #tpu.memory_space<vmem>>, vector<8x64xf32>
      %c0_29 = arith.constant 0 : index
      %c0_30 = arith.constant 0 : index
      %c0_31 = arith.constant 0 : index
      %33 = vector.load %arg8[%c0_29, %c0_30, %c0_31] : memref<1x8x64xf32, #tpu.memory_space<vmem>>, vector<1x8x64xf32>
      %34 = vector.shape_cast %33 : vector<1x8x64xf32> to vector<8x64xf32>
      %35 = vector.shape_cast %32 : vector<8x64xf32> to vector<1x8x64xf32>
      tpu.vector_store %arg8[%c0_29, %c0_30, %c0_31], %35 {strides = array<i32>} : memref<1x8x64xf32, #tpu.memory_space<vmem>>, vector<1x8x64xf32>,
      %c0_32 = arith.constant 0 : index
      %c0_33 = arith.constant 0 : index
      %36 = vector.load %arg11[%c0_32, %c0_33] : memref<8x16xf32, #tpu.memory_space<vmem>>, vector<8x16xf32>
      %37 = arith.fptosi %36 : vector<8x16xf32> to vector<8x16xi32>
      %c0_34 = arith.constant 0 : index
      %c0_35 = arith.constant 0 : index
      %c0_36 = arith.constant 0 : index
      %38 = vector.load %arg9[%c0_34, %c0_35, %c0_36] : memref<1x8x16xi32, #tpu.memory_space<vmem>>, vector<1x8x16xi32>
      %39 = vector.shape_cast %38 : vector<1x8x16xi32> to vector<8x16xi32>
      %40 = vector.shape_cast %37 : vector<8x16xi32> to vector<1x8x16xi32>
      tpu.vector_store %arg9[%c0_34, %c0_35, %c0_36], %40 {strides = array<i32>} : memref<1x8x16xi32, #tpu.memory_space<vmem>>, vector<1x8x16xi32>,
    } else {
    }
    return
  }
  func.func @transform_0(%arg0: i32, %arg1: i32) -> (i32, i32, i32) {
    %c0_i32 = arith.constant 0 : i32
    %c0_i32_0 = arith.constant 0 : i32
    return %arg0, %arg1, %c0_i32 : i32, i32, i32
  }
  func.func @transform_1(%arg0: i32, %arg1: i32) -> (i32, i32, i32) {
    %c0_i32 = arith.constant 0 : i32
    %c0_i32_0 = arith.constant 0 : i32
    return %arg0, %arg1, %c0_i32 : i32, i32, i32
  }
  func.func @transform_2(%arg0: i32, %arg1: i32) -> (i32, i32) {
    %c0_i32 = arith.constant 0 : i32
    %c0_i32_0 = arith.constant 0 : i32
    return %c0_i32, %arg1 : i32, i32
  }
  func.func @transform_3(%arg0: i32, %arg1: i32) -> (i32, i32) {
    %c0_i32 = arith.constant 0 : i32
    %c0_i32_0 = arith.constant 0 : i32
    return %c0_i32, %arg1 : i32, i32
  }
  func.func @transform_4(%arg0: i32, %arg1: i32) -> (i32, i32) {
    %c0_i32 = arith.constant 0 : i32
    %c0_i32_0 = arith.constant 0 : i32
    %c0_i32_1 = arith.constant 0 : i32
    return %c0_i32, %c0_i32_0 : i32, i32
  }
  func.func @transform_5(%arg0: i32, %arg1: i32) -> (i32, i32) {
    %c0_i32 = arith.constant 0 : i32
    %c0_i32_0 = arith.constant 0 : i32
    %c0_i32_1 = arith.constant 0 : i32
    return %c0_i32, %c0_i32_0 : i32, i32
  }
  func.func @transform_6(%arg0: i32, %arg1: i32) -> (i32, i32, i32) {
    %c0_i32 = arith.constant 0 : i32
    %c0_i32_0 = arith.constant 0 : i32
    %c0_i32_1 = arith.constant 0 : i32
    return %arg0, %c0_i32, %c0_i32_0 : i32, i32, i32
  }
  func.func @transform_7(%arg0: i32, %arg1: i32) -> (i32, i32, i32) {
    %c0_i32 = arith.constant 0 : i32
    %c0_i32_0 = arith.constant 0 : i32
    %c0_i32_1 = arith.constant 0 : i32
    return %arg0, %c0_i32, %c0_i32_0 : i32, i32, i32
  }
}

</mosaic_0001>

<llo_original>
// kernel: _fused_scale_crop.1
$region0: #{_fused_scale_crop.1}
  #allocation0 [shape = 'u32[]', space=smem, size = 0x4, offset = 0x4, fixed_abs, tag = 'smem constant byte address 0x4 - core index']
  #allocation1 [shape = 'u32[144,128]{1,0:T(1,128)}', space=vmem, size = 0x12000, scoped, tag = 'internal scratch']
  #allocation2 [shape = 'f32[8,64]{1,0:T(8,128)}', space=vmem, size = 0x1000, scoped, tag = 'scratch operand']
  #allocation3 [shape = 'f32[8,16]{1,0:T(8,128)}', space=vmem, size = 0x1000, scoped, tag = 'scratch operand']
  %s0 = inlined_call_operand.hbm [shape: f32[8,16,32], index: 0, kind: input, shape index: {}]
  %s1 = inlined_call_operand.vmem [shape: s32[2,16,32], index: 1, kind: input, shape index: {}]
  %s2 = inlined_call_operand.vmem [shape: bf16[8,16], index: 2, kind: input, shape index: {}]
  %s3 = inlined_call_operand.vmem [shape: f32[8,16], index: 3, kind: input, shape index: {}]
  %s4 = inlined_call_operand.vmem [shape: bf16[32,16], index: 4, kind: input, shape index: {}]
  %s5 = inlined_call_operand.vmem [shape: f32[32,16], index: 5, kind: input, shape index: {}]
  %s6 = inlined_call_operand.vmem [shape: f32[2,8,64], index: 6, kind: output, shape index: {0}]
  %s7 = inlined_call_operand.hbm [shape: s32[2,8,16], index: 7, kind: output, shape index: {1}]
  %8 = xla_tuple %s6, %s7
  %s9 = sld [smem:[#allocation0]]
  $region77: #{_fused_scale_crop.1} parent=0
    _
  %s11 = ssub.s32 1, %s9
  %s12 = scalar_select 0, %s11, %s9
  $region1: #{_fused_scale_crop.1} parent=0
    #allocation4 [shape = 'u8[65536]{0}', space=vmem, size = 0x10000, scoped, tag = 'input window, operand 0']
    #allocation5 [shape = 's32[2]{0}', space=sflag, size = 0x8, scoped, tag = 'scoped memory for _fused_scale_crop.1']
    #allocation6 [shape = 's32[2]{0}', space=sflag, size = 0x8, scoped, tag = 'scoped memory for _fused_scale_crop.1']
    #allocation7 [shape = 'u8[8192]{0}', space=vmem, size = 0x2000, scoped, tag = 'output window, operand 1']
    %13 = vsyncpa [#allocation5], 0
    %s14 = scalar_lea.sflag [#allocation5], 1
    %15 = vsyncpa %s14, 0
    %16 = vsyncpa [#allocation6], 0
    %s17 = scalar_lea.sflag [#allocation6], 1
    %18 = vsyncpa %s17, 0
    loop: start=0, step=1, limit=4
    $region2: #{_fused_scale_crop.1} parent=1 // loop_pre_header
      _
    $region3: #{_fused_scale_crop.1} parent=1 // loop_header
      %s20 = sphi 0, %s24
      %p21 = scmp.ge.s32.totalorder %s20, 4
      %s27 = sphi 0, %s39
      %s28 = sphi 0, %s35
      %s29 = sphi 0, %s27
      %s30 = sphi 0, %s28
      %s31 = sphi 0, %s29
      %s32 = sphi 0, %s30
      %s44 = sphi 0, %s46
      %s47 = sphi 0, %s44
      %s48 = sphi 0, %s47
      %s64 = sphi 0, %s48
      %s72 = sphi 0, %s74
      %s75 = sphi 0, %s72
      %s76 = sphi 0, %s75
      %s92 = sphi 0, %s76
      %s98 = sphi 0, %s100
      %s101 = sphi 0, %s98
      %s102 = sphi 0, %s101
      %s118 = sphi 0, %s102
      %s124 = sphi 0, %s126
      %s127 = sphi 0, %s124
      %s128 = sphi 0, %s127
      %s144 = sphi 0, %s128
      %s148 = sphi 0, %s148
      %s150 = sphi 0, %s148
      %s151 = sphi 0, %s150
      %s165 = sphi 0, %s151
      %s169 = sphi 0, %s169
      %s171 = sphi 0, %s169
      %s172 = sphi 0, %s171
      %s186 = sphi 0, %s172
      %s192 = sphi 0, %s194
      %s195 = sphi 0, %s192
      %s196 = sphi 0, %s195
      %s212 = sphi 0, %s196
      %s218 = sphi 0, %s220
      %s221 = sphi 0, %s218
      %s222 = sphi 0, %s221
      %s238 = sphi 0, %s222
    $region4: #{_fused_scale_crop.1} parent=1 // loop_header_branch
      %23 = sbr.rel (%p21) target = $region8
    $region5: #{_fused_scale_crop.1} parent=1 // loop_body
      %s25 = ssub.s32 %s20, 1
      %s26 = ssub.s32 %s20, 2
      %s33 = sadd.s32 1, %s28
      %p34 = scmp.ge.s32.totalorder %s33, 1
      %s35 = scalar_select %p34, 0, %s33
      %s36 = sadd.s32 1, %s27
      %s37 = scalar_select %p34, %s36, %s27
      %p38 = scmp.ge.s32.totalorder %s37, 2
      %s39 = scalar_select %p38, 0, %s37
      %s40 = ssub.s32 %s27, %s39
      %s41 = ssub.s32 %s28, %s35
      %s42 = sor.u32 %s40, %s41
      %p43 = scmp.eq.s32.totalorder %s42, 0
      %s45 = sadd.s32 %s44, 1
      %s46 = scalar_select %p43, %s44, %s45
      %p49 = pneg %p43
      %p50 = scmp.eq.s32.totalorder %s20, 1
      %p51 = por %p49, %p50
      %p52 = scmp.ne.s32.totalorder %s44, %s47
      %p53 = scmp.eq.s32.totalorder %s20, 0
      %p54 = por %p52, %p53
      %p55 = scmp.ne.s32.totalorder %s44, %s47
      %p56 = scmp.eq.s32.totalorder %s25, 1
      %p57 = por %p55, %p56
      %p58 = scmp.ne.s32.totalorder %s47, %s48
      %p59 = scmp.eq.s32.totalorder %s25, 0
      %p60 = por %p58, %p59
      %p61 = scmp.ne.s32.totalorder %s47, %s48
      %p62 = scmp.eq.s32.totalorder %s26, 1
      %p63 = por %p61, %p62
      %p65 = scmp.ne.s32.totalorder %s48, %s64
      %p66 = scmp.eq.s32.totalorder %s26, 0
      %p67 = por %p65, %p66
      %s68 = ssub.s32 %s27, %s39
      %s69 = ssub.s32 %s28, %s35
      %s70 = sor.u32 %s68, %s69
      %p71 = scmp.eq.s32.totalorder %s70, 0
      %s73 = sadd.s32 %s72, 1
      %s74 = scalar_select %p71, %s72, %s73
      %p77 = pneg %p71
      %p78 = scmp.eq.s32.totalorder %s20, 1
      %p79 = por %p77, %p78
      %p80 = scmp.ne.s32.totalorder %s72, %s75
      %p81 = scmp.eq.s32.totalorder %s20, 0
      %p82 = por %p80, %p81
      %p83 = scmp.ne.s32.totalorder %s72, %s75
      %p84 = scmp.eq.s32.totalorder %s25, 1
      %p85 = por %p83, %p84
      %p86 = scmp.ne.s32.totalorder %s75, %s76
      %p87 = scmp.eq.s32.totalorder %s25, 0
      %p88 = por %p86, %p87
      %p89 = scmp.ne.s32.totalorder %s75, %s76
      %p90 = scmp.eq.s32.totalorder %s26, 1
      %p91 = por %p89, %p90
      %p93 = scmp.ne.s32.totalorder %s76, %s92
      %p94 = scmp.eq.s32.totalorder %s26, 0
      %p95 = por %p93, %p94
      %s96 = ssub.s32 %s28, %s35
      %p97 = scmp.eq.s32.totalorder %s96, 0
      %s99 = sadd.s32 %s98, 1
      %s100 = scalar_select %p97, %s98, %s99
      %p103 = pneg %p97
      %p104 = scmp.eq.s32.totalorder %s20, 1
      %p105 = por %p103, %p104
      %p106 = scmp.ne.s32.totalorder %s98, %s101
      %p107 = scmp.eq.s32.totalorder %s20, 0
      %p108 = por %p106, %p107
      %p109 = scmp.ne.s32.totalorder %s98, %s101
      %p110 = scmp.eq.s32.totalorder %s25, 1
      %p111 = por %p109, %p110
      %p112 = scmp.ne.s32.totalorder %s101, %s102
      %p113 = scmp.eq.s32.totalorder %s25, 0
      %p114 = por %p112, %p113
      %p115 = scmp.ne.s32.totalorder %s101, %s102
      %p116 = scmp.eq.s32.totalorder %s26, 1
      %p117 = por %p115, %p116
      %p119 = scmp.ne.s32.totalorder %s102, %s118
      %p120 = scmp.eq.s32.totalorder %s26, 0
      %p121 = por %p119, %p120
      %s122 = ssub.s32 %s28, %s35
      %p123 = scmp.eq.s32.totalorder %s122, 0
      %s125 = sadd.s32 %s124, 1
      %s126 = scalar_select %p123, %s124, %s125
      %p129 = pneg %p123
      %p130 = scmp.eq.s32.totalorder %s20, 1
      %p131 = por %p129, %p130
      %p132 = scmp.ne.s32.totalorder %s124, %s127
      %p133 = scmp.eq.s32.totalorder %s20, 0
      %p134 = por %p132, %p133
      %p135 = scmp.ne.s32.totalorder %s124, %s127
      %p136 = scmp.eq.s32.totalorder %s25, 1
      %p137 = por %p135, %p136
      %p138 = scmp.ne.s32.totalorder %s127, %s128
      %p139 = scmp.eq.s32.totalorder %s25, 0
      %p140 = por %p138, %p139
      %p141 = scmp.ne.s32.totalorder %s127, %s128
      %p142 = scmp.eq.s32.totalorder %s26, 1
      %p143 = por %p141, %p142
      %p145 = scmp.ne.s32.totalorder %s128, %s144
      %p146 = scmp.eq.s32.totalorder %s26, 0
      %p147 = por %p145, %p146
      %s149 = sadd.s32 %s148, 1
      %p152 = scmp.eq.s32.totalorder %s20, 1
      %p153 = scmp.ne.s32.totalorder %s148, %s150
      %p154 = scmp.eq.s32.totalorder %s20, 0
      %p155 = por %p153, %p154
      %p156 = scmp.ne.s32.totalorder %s148, %s150
      %p157 = scmp.eq.s32.totalorder %s25, 1
      %p158 = por %p156, %p157
      %p159 = scmp.ne.s32.totalorder %s150, %s151
      %p160 = scmp.eq.s32.totalorder %s25, 0
      %p161 = por %p159, %p160
      %p162 = scmp.ne.s32.totalorder %s150, %s151
      %p163 = scmp.eq.s32.totalorder %s26, 1
      %p164 = por %p162, %p163
      %p166 = scmp.ne.s32.totalorder %s151, %s165
      %p167 = scmp.eq.s32.totalorder %s26, 0
      %p168 = por %p166, %p167
      %s170 = sadd.s32 %s169, 1
      %p173 = scmp.eq.s32.totalorder %s20, 1
      %p174 = scmp.ne.s32.totalorder %s169, %s171
      %p175 = scmp.eq.s32.totalorder %s20, 0
      %p176 = por %p174, %p175
      %p177 = scmp.ne.s32.totalorder %s169, %s171
      %p178 = scmp.eq.s32.totalorder %s25, 1
      %p179 = por %p177, %p178
      %p180 = scmp.ne.s32.totalorder %s171, %s172
      %p181 = scmp.eq.s32.totalorder %s25, 0
      %p182 = por %p180, %p181
      %p183 = scmp.ne.s32.totalorder %s171, %s172
      %p184 = scmp.eq.s32.totalorder %s26, 1
      %p185 = por %p183, %p184
      %p187 = scmp.ne.s32.totalorder %s172, %s186
      %p188 = scmp.eq.s32.totalorder %s26, 0
      %p189 = por %p187, %p188
      %s190 = ssub.s32 %s27, %s39
      %p191 = scmp.eq.s32.totalorder %s190, 0
      %s193 = sadd.s32 %s192, 1
      %s194 = scalar_select %p191, %s192, %s193
      %p197 = pneg %p191
      %p198 = scmp.eq.s32.totalorder %s20, 1
      %p199 = por %p197, %p198
      %p200 = scmp.ne.s32.totalorder %s192, %s195
      %p201 = scmp.eq.s32.totalorder %s20, 0
      %p202 = por %p200, %p201
      %p203 = scmp.ne.s32.totalorder %s192, %s195
      %p204 = scmp.eq.s32.totalorder %s25, 1
      %p205 = por %p203, %p204
      %p206 = scmp.ne.s32.totalorder %s195, %s196
      %p207 = scmp.eq.s32.totalorder %s25, 0
      %p208 = por %p206, %p207
      %p209 = scmp.ne.s32.totalorder %s195, %s196
      %p210 = scmp.eq.s32.totalorder %s26, 1
      %p211 = por %p209, %p210
      %p213 = scmp.ne.s32.totalorder %s196, %s212
      %p214 = scmp.eq.s32.totalorder %s26, 0
      %p215 = por %p213, %p214
      %s216 = ssub.s32 %s27, %s39
      %p217 = scmp.eq.s32.totalorder %s216, 0
      %s219 = sadd.s32 %s218, 1
      %s220 = scalar_select %p217, %s218, %s219
      %p223 = pneg %p217
      %p224 = scmp.eq.s32.totalorder %s20, 1
      %p225 = por %p223, %p224
      %p226 = scmp.ne.s32.totalorder %s218, %s221
      %p227 = scmp.eq.s32.totalorder %s20, 0
      %p228 = por %p226, %p227
      %p229 = scmp.ne.s32.totalorder %s218, %s221
      %p230 = scmp.eq.s32.totalorder %s25, 1
      %p231 = por %p229, %p230
      %p232 = scmp.ne.s32.totalorder %s221, %s222
      %p233 = scmp.eq.s32.totalorder %s25, 0
      %p234 = por %p232, %p233
      %p235 = scmp.ne.s32.totalorder %s221, %s222
      %p236 = scmp.eq.s32.totalorder %s26, 1
      %p237 = por %p235, %p236
      %p239 = scmp.ne.s32.totalorder %s222, %s238
      %p240 = scmp.eq.s32.totalorder %s26, 0
      %p241 = por %p239, %p240
      %p242 = scmp.le.s32.totalorder 1, %s20
      %p243 = scmp.lt.s32.totalorder %s20, 3
      %p244 = pnand %p242, %p243
      %p245 = pneg %p244
      // Predicated region
      $region9: #{_fused_scale_crop.1} parent=5 // pred_check
        _
      $region10: #{_fused_scale_crop.1} parent=5 // pred_check_branch
        %247 = sbr.rel (%p244) target = $region12
      $region11: #{_fused_scale_crop.1} parent=5 // pred_region
        %s248 = ssub.s32 %s20, 1
        // Predicated region
        $region13: #{_fused_scale_crop.1} parent=11 // pred_check
          %p249 = pneg %p114
        $region14: #{_fused_scale_crop.1} parent=11 // pred_check_branch
          %251 = sbr.rel (%p249) target = $region16
        $region15: #{_fused_scale_crop.1} parent=11 // pred_region
          %p252 = scmp.lt.s32.totalorder %s30, 0
          %s253 = scalar_select %p252, %s30, 0
          %s254 = smul.addr %s253, 4
          %s255 = scalar_lea.vmem %s2, %s254
        $region16: #{_fused_scale_crop.1} parent=11 // pred_fallthru
          _
        // Predicated region
        $region17: #{_fused_scale_crop.1} parent=11 // pred_check
          %p256 = pneg %p140
        $region18: #{_fused_scale_crop.1} parent=11 // pred_check_branch
          %258 = sbr.rel (%p256) target = $region20
        $region19: #{_fused_scale_crop.1} parent=11 // pred_region
          %p259 = scmp.lt.s32.totalorder %s30, 0
          %s260 = scalar_select %p259, %s30, 0
          %s261 = smul.addr %s260, 8
          %s262 = scalar_lea.vmem %s3, %s261
        $region20: #{_fused_scale_crop.1} parent=11 // pred_fallthru
          _
        // Predicated region
        $region21: #{_fused_scale_crop.1} parent=11 // pred_check
          %p263 = pneg %p161
        $region22: #{_fused_scale_crop.1} parent=11 // pred_check_branch
          %265 = sbr.rel (%p263) target = $region24
        $region23: #{_fused_scale_crop.1} parent=11 // pred_region
          _
        $region24: #{_fused_scale_crop.1} parent=11 // pred_fallthru
          _
        // Predicated region
        $region25: #{_fused_scale_crop.1} parent=11 // pred_check
          %p266 = pneg %p182
        $region26: #{_fused_scale_crop.1} parent=11 // pred_check_branch
          %268 = sbr.rel (%p266) target = $region28
        $region27: #{_fused_scale_crop.1} parent=11 // pred_region
          _
        $region28: #{_fused_scale_crop.1} parent=11 // pred_fallthru
          _
      $region12: #{_fused_scale_crop.1} parent=5 // pred_fallthru
        _
      %p269 = scmp.lt.s32.totalorder %s20, 2
      // Predicated region
      $region29: #{_fused_scale_crop.1} parent=5 // pred_check
        %p270 = pneg %p269
      $region30: #{_fused_scale_crop.1} parent=5 // pred_check_branch
        %272 = sbr.rel (%p270) target = $region32
      $region31: #{_fused_scale_crop.1} parent=5 // pred_region
        // Predicated region
        $region33: #{_fused_scale_crop.1} parent=31 // pred_check
          %p273 = pneg %p54
        $region34: #{_fused_scale_crop.1} parent=31 // pred_check_branch
          %275 = sbr.rel (%p273) target = $region36
        $region35: #{_fused_scale_crop.1} parent=31 // pred_region
          %s276 = sand.u32 %s44, 1
          %s277 = scalar_lea.sflag [#allocation5], %s276
          %s278 = sand.u32 %s44, 1
          %s279 = smul.addr %s278, 64
          %s280 = scalar_lea.vmem [#allocation4], %s279
          %s281 = smul.u32 4, %s27
          %s282 = smul.u32 2, %s28
          %s284 = ssub.s32 1024, 1024
          %285 = vsyncadd %s277, %s284
          %s286 = smul.addr %s281, 2
          %s287 = sadd.s32 %s282, %s286
          %s288 = smul.addr %s287, 128
          %s289 = scalar_lea.hbm %s0, %s288
          %s290 = sshll.u32 %s280, 4
          %s291 = int_to_ptr.vmem [resolvable:$true] %s290
          %296 = dma.hbm_to_vmem [thread:$0]  %s289, 1024, %s291, %s277, 128, 128, 8
        $region36: #{_fused_scale_crop.1} parent=31 // pred_fallthru
          _
        // Predicated region
        $region37: #{_fused_scale_crop.1} parent=31 // pred_check
          %p297 = pneg %p82
        $region38: #{_fused_scale_crop.1} parent=31 // pred_check_branch
          %299 = sbr.rel (%p297) target = $region40
        $region39: #{_fused_scale_crop.1} parent=31 // pred_region
          %s300 = smul.u32 2, %s28
          %p301 = scmp.lt.s32.totalorder %s27, 1
          %s302 = scalar_select %p301, %s27, 1
          %p303 = scmp.lt.s32.totalorder %s300, 1
          %s304 = scalar_select %p303, %s300, 1
          %s305 = smul.addr %s302, 2
          %s306 = sadd.s32 %s304, %s305
          %s307 = smul.addr %s306, 8
          %s308 = scalar_lea.vmem %s1, %s307
          %s309 = smul.u32 2, %s28
        $region40: #{_fused_scale_crop.1} parent=31 // pred_fallthru
          _
      $region32: #{_fused_scale_crop.1} parent=5 // pred_fallthru
        _
      %p310 = scmp.le.s32.totalorder 1, %s20
      %p311 = scmp.lt.s32.totalorder %s20, 3
      %p312 = pnand %p310, %p311
      %p313 = pneg %p312
      // Predicated region
      $region41: #{_fused_scale_crop.1} parent=5 // pred_check
        _
      $region42: #{_fused_scale_crop.1} parent=5 // pred_check_branch
        %315 = sbr.rel (%p312) target = $region44
      $region43: #{_fused_scale_crop.1} parent=5 // pred_region
        %s316 = ssub.s32 %s20, 1
        %s317 = sand.u32 %s47, 1
        %s318 = scalar_lea.sflag [#allocation5], %s317
        %s319 = sand.u32 %s47, 1
        %s320 = smul.addr %s319, 64
        %s321 = scalar_lea.vmem [#allocation4], %s320
        // Predicated region
        $region45: #{_fused_scale_crop.1} parent=43 // pred_check
          %p322 = pneg %p60
        $region46: #{_fused_scale_crop.1} parent=43 // pred_check_branch
          %324 = sbr.rel (%p322) target = $region48
        $region47: #{_fused_scale_crop.1} parent=43 // pred_region
          %325 = dma.done %s318, 1024
        $region48: #{_fused_scale_crop.1} parent=43 // pred_fallthru
          _
        %s326 = sand.u32 %s47, 1
        %s327 = scalar_lea.sflag [#allocation5], %s326
        %s328 = sand.u32 %s47, 1
        %s329 = smul.addr %s328, 64
        %s330 = scalar_lea.vmem [#allocation4], %s329
        %p331 = pneg %p60
        %p332 = pneg %p57
        %s333 = smul.u32 2, %s30
        %p334 = scmp.lt.s32.totalorder %s29, 1
        %s335 = scalar_select %p334, %s29, 1
        %p336 = scmp.lt.s32.totalorder %s333, 1
        %s337 = scalar_select %p336, %s333, 1
        %s338 = smul.addr %s335, 2
        %s339 = sadd.s32 %s337, %s338
        %s340 = smul.addr %s339, 8
        %s341 = scalar_lea.vmem %s1, %s340
        %p342 = pneg %p88
        %p343 = pneg %p85
        %p344 = scmp.lt.s32.totalorder %s30, 0
        %s345 = scalar_select %p344, %s30, 0
        %s346 = smul.addr %s345, 4
        %s347 = scalar_lea.vmem %s2, %s346
        %p348 = pneg %p114
        %p349 = pneg %p111
        %p350 = scmp.lt.s32.totalorder %s30, 0
        %s351 = scalar_select %p350, %s30, 0
        %s352 = smul.addr %s351, 8
        %s353 = scalar_lea.vmem %s3, %s352
        %p354 = pneg %p140
        %p355 = pneg %p137
        %p356 = pneg %p161
        %p357 = pneg %p158
        %p358 = pneg %p182
        %p359 = pneg %p179
        %p360 = pneg %p208
        %p361 = pneg %p205
        %p362 = scmp.lt.s32.totalorder %s29, 1
        %s363 = scalar_select %p362, %s29, 1
        %s364 = smul.addr %s363, 8
        %s365 = scalar_lea.vmem %s6, %s364
        %p366 = pneg %p234
        %p367 = pneg %p231
        %s368 = sand.u32 %s221, 1
        %s369 = scalar_lea.sflag [#allocation6], %s368
        %s370 = sand.u32 %s221, 1
        %s371 = smul.addr %s370, 8
        %s372 = scalar_lea.vmem [#allocation7], %s371
        %s373 = smul.u32 4, %s29
        %s374 = smul.u32 2, %s30
        %s375 = smul.u32 2, %s30
        %p376 = scmp.lt.s32.totalorder %s29, 1
        %s377 = scalar_select %p376, %s29, 1
        %p378 = scmp.lt.s32.totalorder %s375, 1
        %s379 = scalar_select %p378, %s375, 1
        %s380 = smul.addr %s377, 2
        %s381 = sadd.s32 %s379, %s380
        %s382 = smul.addr %s381, 8
        %s383 = scalar_lea.vmem %s1, %s382
        %s384 = smul.u32 2, %s30
        %p385 = scmp.lt.s32.totalorder %s30, 0
        %s386 = scalar_select %p385, %s30, 0
        %s387 = smul.addr %s386, 4
        %s388 = scalar_lea.vmem %s2, %s387
        %p389 = scmp.lt.s32.totalorder %s30, 0
        %s390 = scalar_select %p389, %s30, 0
        %s391 = smul.addr %s390, 8
        %s392 = scalar_lea.vmem %s3, %s391
        %p393 = scmp.lt.s32.totalorder %s29, 1
        %s394 = scalar_select %p393, %s29, 1
        %s395 = smul.addr %s394, 8
        %s396 = scalar_lea.vmem %s6, %s395
        %p398 = scmp.eq.s32.totalorder %s30, 0
        // Predicated region
        $region49: #{_fused_scale_crop.1} parent=43 // pred_check
          %p399 = pneg %p398
        $region50: #{_fused_scale_crop.1} parent=43 // pred_check_branch
          %401 = sbr.rel (%p399) target = $region52
        $region51: #{_fused_scale_crop.1} parent=43 // pred_region
          %vm402 = vcmask 523264
          %403 = vst.msk [vmem:[#allocation2] sm:$0xff] %vm402, 0.0
          %vm404 = vcmask 130048
          %405 = vst.msk [vmem:[#allocation3] sm:$0xff] %vm404, 0.0
        $region52: #{_fused_scale_crop.1} parent=43 // pred_fallthru
          _
        %v406 = vld [vmem:[%s321] sm:$0xff]
        %v407 = vld [vmem:[%s321 + $0x8] sm:$0xff]
        %v408 = vld [vmem:[%s321 + $0x10] sm:$0xff]
        %v409 = vld [vmem:[%s321 + $0x18] sm:$0xff]
        %v410 = vld [vmem:[%s321 + $0x20] sm:$0xff]
        %v411 = vld [vmem:[%s321 + $0x28] sm:$0xff]
        %v412 = vld [vmem:[%s321 + $0x30] sm:$0xff]
        %v413 = vld [vmem:[%s321 + $0x38] sm:$0xff]
        %v414 = vpack.c.bf16 %v407, %v406
        %v415 = vpack.c.bf16 %v409, %v408
        %v416 = vpack.c.bf16 %v411, %v410
        %v417 = vpack.c.bf16 %v413, %v412
        %v418 = vld [vmem:[%s4] sm:$0xf]
        %v419 = vld [vmem:[%s4 + $0x4] sm:$0xf]
        %v420 = vld [vmem:[%s4 + $0x8] sm:$0xf]
        %v421 = vld [vmem:[%s4 + $0xc] sm:$0xf]
        %v426 = vunpack.c.l.b16 %v418
        %v427 = vunpack.c.l.b16 %v419
        %v428 = vunpack.c.l.b16 %v420
        %v429 = vunpack.c.l.b16 %v421
        %v430 = vpack.c.b16 %v427, %v426
        %v431 = vpack.c.b16 %v429, %v428
        %vm434 = vcmask 261120
        %v436 = vsel %vm434, %v414, 0
        %v439 = vsel %vm434, %v415, 0
        %v442 = vsel %vm434, %v416, 0
        %v445 = vsel %vm434, %v417, 0
        %447 = vmatprep.subr.bf16.mxu0 0
        %448 = vmatpush1.bf16.msra.mxu0 %v430
        %449 = vmatprep.subr.bf16.mxu0 0
        %450 = vmatpush1.bf16.msra.mxu0 %v431
        %451 = vmatprep.subr.bf16.mxu0 0
        %452 = vmatpush1.bf16.msra.mxu0 0
        %453 = vmatprep.subr.bf16.mxu0 0
        %454 = vmatpush1.bf16.msra.mxu0 0
        %455 = vmatprep.subr.bf16.mxu0 0
        %456 = vmatpush1.bf16.msra.mxu0 0
        %457 = vmatprep.subr.bf16.mxu0 0
        %458 = vmatpush1.bf16.msra.mxu0 0
        %459 = vmatprep.subr.bf16.mxu0 0
        %460 = vmatpush1.bf16.msra.mxu0 0
        %461 = vmatprep.subr.bf16.mxu0 0
        %462 = vmatpush1.bf16.msra.mxu0 0
        %463 = vmatprep.subr.bf16.mxu0 0
        %464 = vmatpush1.bf16.msra.mxu0 0
        %465 = vmatprep.subr.bf16.mxu0 0
        %466 = vmatpush1.bf16.msra.mxu0 0
        %467 = vmatprep.subr.bf16.mxu0 0
        %468 = vmatpush1.bf16.msra.mxu0 0
        %469 = vmatprep.subr.bf16.mxu0 0
        %470 = vmatpush1.bf16.msra.mxu0 0
        %471 = vmatprep.subr.bf16.mxu0 0
        %472 = vmatpush1.bf16.msra.mxu0 0
        %473 = vmatprep.subr.bf16.mxu0 0
        %474 = vmatpush1.bf16.msra.mxu0 0
        %475 = vmatprep.subr.bf16.mxu0 0
        %476 = vmatpush1.bf16.msra.mxu0 0
        %477 = vmatprep.subr.bf16.mxu0 0
        %478 = vmatpush1.bf16.msra.mxu0 0
        %479 = vmatprep.mubr.bf16.mxu0 0
        %480 = vmatmul.mubr.bf16.gmra.mrb[0].mxu0 %v436
        %v481 = vpop.f32.mrb[0].mxu0
        %v482 = vadd.f32 0.0, %v481
        %v483 = vpop.f32.mrb[0].mxu0
        %v484 = vpop.f32.mrb[0].mxu0
        %v485 = vadd.f32 0.0, %v484
        %v486 = vpop.f32.mrb[0].mxu0
        %487 = vmatprep.mubr.bf16.mxu0 0
        %488 = vmatmul.mubr.bf16.gmra.mrb[0].mxu0 %v439
        %v489 = vpop.f32.mrb[0].mxu0
        %v490 = vadd.f32 0.0, %v489
        %v491 = vpop.f32.mrb[0].mxu0
        %v492 = vpop.f32.mrb[0].mxu0
        %v493 = vadd.f32 0.0, %v492
        %v494 = vpop.f32.mrb[0].mxu0
        %495 = vmatprep.mubr.bf16.mxu0 0
        %496 = vmatmul.mubr.bf16.gmra.mrb[0].mxu0 %v442
        %v497 = vpop.f32.mrb[0].mxu0
        %v498 = vadd.f32 0.0, %v497
        %v499 = vpop.f32.mrb[0].mxu0
        %v500 = vpop.f32.mrb[0].mxu0
        %v501 = vadd.f32 0.0, %v500
        %v502 = vpop.f32.mrb[0].mxu0
        %503 = vmatprep.mubr.bf16.mxu0 0
        %504 = vmatmul.mubr.bf16.gmra.mrb[0].mxu0 %v445
        %v505 = vpop.f32.mrb[0].mxu0
        %v506 = vadd.f32 0.0, %v505
        %v507 = vpop.f32.mrb[0].mxu0
        %v508 = vpop.f32.mrb[0].mxu0
        %v509 = vadd.f32 0.0, %v508
        %v510 = vpop.f32.mrb[0].mxu0
        %511 = vdwg.mxu0
        %514 = vrot.lane.b32.xlu0 %v490, 16
        %v515 = vpop.permute.xlu0 %514
        %516 = vrot.lane.b32.xlu0 %v493, 16
        %v517 = vpop.permute.xlu0 %516
        %522 = vrot.lane.b32.xlu0 %v498, 32
        %v523 = vpop.permute.xlu0 %522
        %524 = vrot.lane.b32.xlu0 %v501, 32
        %v525 = vpop.permute.xlu0 %524
        %530 = vrot.lane.b32.xlu0 %v506, 48
        %v531 = vpop.permute.xlu0 %530
        %532 = vrot.lane.b32.xlu0 %v509, 48
        %v533 = vpop.permute.xlu0 %532
        %vm536 = vcmask 130048
        %v537 = vsel %vm536, %v482, %v515
        %v538 = vsel %vm536, %v485, %v517
        %v539 = vsel %vm434, %v537, %v523
        %v540 = vsel %vm434, %v538, %v525
        %vm541 = vcmask 392192
        %v542 = vsel %vm541, %v539, %v531
        %v543 = vsel %vm541, %v540, %v533
        %v544 = vld [vmem:[#allocation2] sm:$0xff]
        %v545 = vld [vmem:[%s388] sm:$0xf]
        %v546 = vpack.c.bf16 %v543, %v542
        %v548 = vsel %vm536, %v545, 0
        %550 = vmatprep.subr.bf16.mxu0 0
        %551 = vmatpush1.bf16.msra.mxu0 %v546
        %552 = vmatprep.subr.bf16.mxu0 0
        %553 = vmatpush1.bf16.msra.mxu0 0
        %554 = vmatprep.subr.bf16.mxu0 0
        %555 = vmatpush1.bf16.msra.mxu0 0
        %556 = vmatprep.subr.bf16.mxu0 0
        %557 = vmatpush1.bf16.msra.mxu0 0
        %558 = vmatprep.subr.bf16.mxu0 0
        %559 = vmatpush1.bf16.msra.mxu0 0
        %560 = vmatprep.subr.bf16.mxu0 0
        %561 = vmatpush1.bf16.msra.mxu0 0
        %562 = vmatprep.subr.bf16.mxu0 0
        %563 = vmatpush1.bf16.msra.mxu0 0
        %564 = vmatprep.subr.bf16.mxu0 0
        %565 = vmatpush1.bf16.msra.mxu0 0
        %566 = vmatprep.subr.bf16.mxu0 0
        %567 = vmatpush1.bf16.msra.mxu0 0
        %568 = vmatprep.subr.bf16.mxu0 0
        %569 = vmatpush1.bf16.msra.mxu0 0
        %570 = vmatprep.subr.bf16.mxu0 0
        %571 = vmatpush1.bf16.msra.mxu0 0
        %572 = vmatprep.subr.bf16.mxu0 0
        %573 = vmatpush1.bf16.msra.mxu0 0
        %574 = vmatprep.subr.bf16.mxu0 0
        %575 = vmatpush1.bf16.msra.mxu0 0
        %576 = vmatprep.subr.bf16.mxu0 0
        %577 = vmatpush1.bf16.msra.mxu0 0
        %578 = vmatprep.subr.bf16.mxu0 0
        %579 = vmatpush1.bf16.msra.mxu0 0
        %580 = vmatprep.subr.bf16.mxu0 0
        %581 = vmatpush1.bf16.msra.mxu0 0
        %582 = vmatprep.mubr.bf16.mxu0 0
        %583 = vmatmul.mubr.bf16.gmra.mrb[0].mxu0 %v548
        %v584 = vpop.f32.mrb[0].mxu0
        %v585 = vadd.f32 0.0, %v584
        %v586 = vpop.f32.mrb[0].mxu0
        %v587 = vpop.f32.mrb[0].mxu0
        %v588 = vpop.f32.mrb[0].mxu0
        %589 = vdwg.mxu0
        %v590 = vadd.f32 %v544, %v585
        %vm591 = vcmask 523264
        %592 = vst.msk [vmem:[#allocation2] sm:$0xff] %vm591, %v590
        %v593 = vld [vmem:[%s383] sm:$0xff]
        %v594 = vld [vmem:[%s383 + $0x8] sm:$0xff]
        %v595 = vcvt.s32.f32 %v593
        %v596 = vcvt.s32.f32 %v594
        %v597 = vld [vmem:[%s392] sm:$0xff]
        %v599 = vsel %vm536, %v597, 0
        %601 = vmatprep.subr.mxu0 0.0
        %602 = vmatpush1.msra.mxu0 %v595
        %603 = vmatprep.subr.mxu0 0.0
        %604 = vmatpush1.msra.mxu0 %v596
        %605 = vmatprep.subr.mxu0 0.0
        %606 = vmatpush1.msra.mxu0 0.0
        %607 = vmatprep.subr.mxu0 0.0
        %608 = vmatpush1.msra.mxu0 0.0
        %609 = vmatprep.subr.mxu0 0.0
        %610 = vmatpush1.msra.mxu0 0.0
        %611 = vmatprep.subr.mxu0 0.0
        %612 = vmatpush1.msra.mxu0 0.0
        %613 = vmatprep.subr.mxu0 0.0
        %614 = vmatpush1.msra.mxu0 0.0
        %615 = vmatprep.subr.mxu0 0.0
        %616 = vmatpush1.msra.mxu0 0.0
        %617 = vmatprep.subr.mxu0 0.0
        %618 = vmatpush1.msra.mxu0 0.0
        %619 = vmatprep.subr.mxu0 0.0
        %620 = vmatpush1.msra.mxu0 0.0
        %621 = vmatprep.subr.mxu0 0.0
        %622 = vmatpush1.msra.mxu0 0.0
        %623 = vmatprep.subr.mxu0 0.0
        %624 = vmatpush1.msra.mxu0 0.0
        %625 = vmatprep.subr.mxu0 0.0
        %626 = vmatpush1.msra.mxu0 0.0
        %627 = vmatprep.subr.mxu0 0.0
        %628 = vmatpush1.msra.mxu0 0.0
        %629 = vmatprep.subr.mxu0 0.0
        %630 = vmatpush1.msra.mxu0 0.0
        %631 = vmatprep.subr.mxu0 0.0
        %632 = vmatpush1.msra.mxu0 0.0
        %633 = vmatprep.subr.mxu0 0.0
        %634 = vmatpush1.msra.mxu0 0.0
        %635 = vmatprep.subr.mxu0 0.0
        %636 = vmatpush1.msra.mxu0 0.0
        %637 = vmatprep.subr.mxu0 0.0
        %638 = vmatpush1.msra.mxu0 0.0
        %639 = vmatprep.subr.mxu0 0.0
        %640 = vmatpush1.msra.mxu0 0.0
        %641 = vmatprep.subr.mxu0 0.0
        %642 = vmatpush1.msra.mxu0 0.0
        %643 = vmatprep.subr.mxu0 0.0
        %644 = vmatpush1.msra.mxu0 0.0
        %645 = vmatprep.subr.mxu0 0.0
        %646 = vmatpush1.msra.mxu0 0.0
        %647 = vmatprep.subr.mxu0 0.0
        %648 = vmatpush1.msra.mxu0 0.0
        %649 = vmatprep.subr.mxu0 0.0
        %650 = vmatpush1.msra.mxu0 0.0
        %651 = vmatprep.subr.mxu0 0.0
        %652 = vmatpush1.msra.mxu0 0.0
        %653 = vmatprep.subr.mxu0 0.0
        %654 = vmatpush1.msra.mxu0 0.0
        %655 = vmatprep.subr.mxu0 0.0
        %656 = vmatpush1.msra.mxu0 0.0
        %657 = vmatprep.subr.mxu0 0.0
        %658 = vmatpush1.msra.mxu0 0.0
        %659 = vmatprep.subr.mxu0 0.0
        %660 = vmatpush1.msra.mxu0 0.0
        %661 = vmatprep.subr.mxu0 0.0
        %662 = vmatpush1.msra.mxu0 0.0
        %663 = vmatprep.subr.mxu0 0.0
        %664 = vmatpush1.msra.mxu0 0.0
        %665 = vmatprep.mubr.f32.mxu0 0.0
        %666 = vmatmul.mubr.f32.gmra.mrb[0].mxu0 %v599
        %v667 = vpop.f32.mrb[0].mxu0
        %v668 = vadd.f32 0.0, %v667
        %v669 = vpop.f32.mrb[0].mxu0
        %670 = vdwg.mxu0
        %v671 = vld [vmem:[#allocation3] sm:$0xff]
        %v672 = vld [vmem:[%s5] sm:$0xff]
        %v673 = vld [vmem:[%s5 + $0x8] sm:$0xff]
        %v674 = vld [vmem:[%s5 + $0x10] sm:$0xff]
        %v675 = vld [vmem:[%s5 + $0x18] sm:$0xff]
        %v677 = vsel %vm434, %v668, 0
        %679 = vmatprep.subr.mxu0 0.0
        %680 = vmatpush1.msra.mxu0 %v672
        %681 = vmatprep.subr.mxu0 0.0
        %682 = vmatpush1.msra.mxu0 %v673
        %683 = vmatprep.subr.mxu0 0.0
        %684 = vmatpush1.msra.mxu0 %v674
        %685 = vmatprep.subr.mxu0 0.0
        %686 = vmatpush1.msra.mxu0 %v675
        %687 = vmatprep.subr.mxu0 0.0
        %688 = vmatpush1.msra.mxu0 0.0
        %689 = vmatprep.subr.mxu0 0.0
        %690 = vmatpush1.msra.mxu0 0.0
        %691 = vmatprep.subr.mxu0 0.0
        %692 = vmatpush1.msra.mxu0 0.0
        %693 = vmatprep.subr.mxu0 0.0
        %694 = vmatpush1.msra.mxu0 0.0
        %695 = vmatprep.subr.mxu0 0.0
        %696 = vmatpush1.msra.mxu0 0.0
        %697 = vmatprep.subr.mxu0 0.0
        %698 = vmatpush1.msra.mxu0 0.0
        %699 = vmatprep.subr.mxu0 0.0
        %700 = vmatpush1.msra.mxu0 0.0
        %701 = vmatprep.subr.mxu0 0.0
        %702 = vmatpush1.msra.mxu0 0.0
        %703 = vmatprep.subr.mxu0 0.0
        %704 = vmatpush1.msra.mxu0 0.0
        %705 = vmatprep.subr.mxu0 0.0
        %706 = vmatpush1.msra.mxu0 0.0
        %707 = vmatprep.subr.mxu0 0.0
        %708 = vmatpush1.msra.mxu0 0.0
        %709 = vmatprep.subr.mxu0 0.0
        %710 = vmatpush1.msra.mxu0 0.0
        %711 = vmatprep.subr.mxu0 0.0
        %712 = vmatpush1.msra.mxu0 0.0
        %713 = vmatprep.subr.mxu0 0.0
        %714 = vmatpush1.msra.mxu0 0.0
        %715 = vmatprep.subr.mxu0 0.0
        %716 = vmatpush1.msra.mxu0 0.0
        %717 = vmatprep.subr.mxu0 0.0
        %718 = vmatpush1.msra.mxu0 0.0
        %719 = vmatprep.subr.mxu0 0.0
        %720 = vmatpush1.msra.mxu0 0.0
        %721 = vmatprep.subr.mxu0 0.0
        %722 = vmatpush1.msra.mxu0 0.0
        %723 = vmatprep.subr.mxu0 0.0
        %724 = vmatpush1.msra.mxu0 0.0
        %725 = vmatprep.subr.mxu0 0.0
        %726 = vmatpush1.msra.mxu0 0.0
        %727 = vmatprep.subr.mxu0 0.0
        %728 = vmatpush1.msra.mxu0 0.0
        %729 = vmatprep.subr.mxu0 0.0
        %730 = vmatpush1.msra.mxu0 0.0
        %731 = vmatprep.subr.mxu0 0.0
        %732 = vmatpush1.msra.mxu0 0.0
        %733 = vmatprep.subr.mxu0 0.0
        %734 = vmatpush1.msra.mxu0 0.0
        %735 = vmatprep.subr.mxu0 0.0
        %736 = vmatpush1.msra.mxu0 0.0
        %737 = vmatprep.subr.mxu0 0.0
        %738 = vmatpush1.msra.mxu0 0.0
        %739 = vmatprep.subr.mxu0 0.0
        %740 = vmatpush1.msra.mxu0 0.0
        %741 = vmatprep.subr.mxu0 0.0
        %742 = vmatpush1.msra.mxu0 0.0
        %743 = vmatprep.mubr.f32.mxu0 0.0
        %744 = vmatmul.mubr.f32.gmra.mrb[0].mxu0 %v677
        %v745 = vpop.f32.mrb[0].mxu0
        %v746 = vadd.f32 0.0, %v745
        %v747 = vpop.f32.mrb[0].mxu0
        %748 = vdwg.mxu0
        %v749 = vadd.f32 %v671, %v746
        %750 = vst.msk [vmem:[#allocation3] sm:$0xff] %vm536, %v749
        // Predicated region
        $region53: #{_fused_scale_crop.1} parent=43 // pred_check
          %p751 = pneg %p398
        $region54: #{_fused_scale_crop.1} parent=43 // pred_check_branch
          %753 = sbr.rel (%p751) target = $region56
        $region55: #{_fused_scale_crop.1} parent=43 // pred_region
          %v754 = vld [vmem:[#allocation2] sm:$0xff]
          %755 = vst.msk [vmem:[%s396] sm:$0xff] %vm591, %v754
          %v756 = vld [vmem:[#allocation3] sm:$0xff]
          %v757 = vcvt.f32.s32.to.zero.pseudo %v756
          %758 = vst.msk [vmem:[%s372] sm:$0xff] %vm536, %v757
        $region56: #{_fused_scale_crop.1} parent=43 // pred_fallthru
          _
        %p759 = scmp.lt.s32.totalorder %s29, 1
        %s760 = scalar_select %p759, %s29, 1
        %s761 = smul.addr %s760, 8
        %s762 = scalar_lea.vmem %s6, %s761
        %s763 = sand.u32 %s221, 1
        %s764 = scalar_lea.sflag [#allocation6], %s763
        %s765 = sand.u32 %s221, 1
        %s766 = smul.addr %s765, 8
        %s767 = scalar_lea.vmem [#allocation7], %s766
        // Predicated region
        $region57: #{_fused_scale_crop.1} parent=43 // pred_check
          %p768 = pneg %p205
        $region58: #{_fused_scale_crop.1} parent=43 // pred_check_branch
          %770 = sbr.rel (%p768) target = $region60
        $region59: #{_fused_scale_crop.1} parent=43 // pred_region
          _
        $region60: #{_fused_scale_crop.1} parent=43 // pred_fallthru
          _
        // Predicated region
        $region61: #{_fused_scale_crop.1} parent=43 // pred_check
          %p771 = pneg %p231
        $region62: #{_fused_scale_crop.1} parent=43 // pred_check_branch
          %773 = sbr.rel (%p771) target = $region64
        $region63: #{_fused_scale_crop.1} parent=43 // pred_region
          %s775 = ssub.s32 128, 128
          %776 = vsyncadd %s764, %s775
          %s777 = smul.addr %s29, 128
          %s778 = scalar_lea.hbm %s7, %s777
          %s780 = sshll.u32 %s767, 4
          %s781 = int_to_ptr.vmem [resolvable:$true] %s780
          %783 = dma.vmem_to_hbm [thread:$0]  %s781, 128, %s778, %s764
        $region64: #{_fused_scale_crop.1} parent=43 // pred_fallthru
          _
      $region44: #{_fused_scale_crop.1} parent=5 // pred_fallthru
        _
      %p784 = scmp.le.s32.totalorder 2, %s20
      // Predicated region
      $region65: #{_fused_scale_crop.1} parent=5 // pred_check
        %p785 = pneg %p784
      $region66: #{_fused_scale_crop.1} parent=5 // pred_check_branch
        %787 = sbr.rel (%p785) target = $region68
      $region67: #{_fused_scale_crop.1} parent=5 // pred_region
        %s788 = ssub.s32 %s20, 2
        // Predicated region
        $region69: #{_fused_scale_crop.1} parent=67 // pred_check
          %p789 = pneg %p211
        $region70: #{_fused_scale_crop.1} parent=67 // pred_check_branch
          %791 = sbr.rel (%p789) target = $region72
        $region71: #{_fused_scale_crop.1} parent=67 // pred_region
          %p792 = scmp.lt.s32.totalorder %s31, 1
          %s793 = scalar_select %p792, %s31, 1
          %s794 = smul.addr %s793, 8
          %s795 = scalar_lea.vmem %s6, %s794
        $region72: #{_fused_scale_crop.1} parent=67 // pred_fallthru
          _
        // Predicated region
        $region73: #{_fused_scale_crop.1} parent=67 // pred_check
          %p796 = pneg %p237
        $region74: #{_fused_scale_crop.1} parent=67 // pred_check_branch
          %798 = sbr.rel (%p796) target = $region76
        $region75: #{_fused_scale_crop.1} parent=67 // pred_region
          %s799 = sand.u32 %s222, 1
          %s800 = scalar_lea.sflag [#allocation6], %s799
          %s801 = sand.u32 %s222, 1
          %s802 = smul.addr %s801, 8
          %s803 = scalar_lea.vmem [#allocation7], %s802
          %804 = dma.done %s800, 128
        $region76: #{_fused_scale_crop.1} parent=67 // pred_fallthru
          _
      $region68: #{_fused_scale_crop.1} parent=5 // pred_fallthru
        _
    $region6: #{_fused_scale_crop.1} parent=1 // loop_footer
      %s24 = sadd.s32 1, %s20
    $region7: #{_fused_scale_crop.1} parent=1 // loop_footer_branch
      %19 = sbr.rel target = $region3
    $region8: #{_fused_scale_crop.1} parent=1 // loop_exit
      _
    %805 = vsyncpa [#allocation5], 1
    %s806 = scalar_lea.sflag [#allocation5], 1
    %807 = vsyncpa %s806, 1
    %808 = vsyncpa [#allocation6], 1
    %s809 = scalar_lea.sflag [#allocation6], 1
    %810 = vsyncpa %s809, 1

</llo_original>
